<compile_context>
chip_gen: v6e
topology: v6e:2x2x1
jax: 0.10.0
libtpu: 0.0.40
codegen_flags: <defaults>
</compile_context>

<pallas_src>
import jax
import jax.numpy as jnp
from jax import lax
from jax.experimental import pallas as pl

# ---- hyperparameters (module globals in the original script) ----
n_embd = 32
num_heads = 4
head_size = 8          # n_embd // num_heads
block_size = 8         # max sequence length (causal mask size)
dropout = 0.0          # inference: dropout is identity


def multi_head_attention(x, wq, wk, wv, wo, bo, matmul_dtype=jnp.float32):
    """x: (B, T, C); wq/wk/wv: (H, C, Dh) per-head weights (nn.Linear, no bias);
    wo: (H*Dh, C); bo: (1, C).  Returns (B, T, C) float32."""
    B, T, C = x.shape
    H, _, Dh = wq.shape
    HD = H * Dh
    BT = B * T
    scale = Dh ** -0.5

    # ---- layout plumbing (outside the kernel) ----
    #  * fuse per-head Q/K/V into one (C, 3*H*Dh) matrix, columns (h, d)-major;
    #  * fold the 1/sqrt(Dh) attention scale into the Q columns (free);
    #  * flatten the batch into the row dimension;
    #  * block-diagonal causal additive bias so folded rows never attend
    #    across batch elements.
    wq_f = jnp.transpose(wq * scale, (1, 0, 2)).reshape(C, HD)
    wk_f = jnp.transpose(wk, (1, 0, 2)).reshape(C, HD)
    wv_f = jnp.transpose(wv, (1, 0, 2)).reshape(C, HD)
    wqkv = jnp.concatenate([wq_f, wk_f, wv_f], axis=1)            # (C, 3*HD)

    r = jnp.arange(BT)
    same_batch = (r[:, None] // T) == (r[None, :] // T)
    causal = (r[:, None] % T) >= (r[None, :] % T)
    bias = jnp.where(same_batch & causal, 0.0, -jnp.inf).astype(jnp.float32)  # (BT, BT)

    x2d = x.reshape(BT, C).astype(matmul_dtype)
    wqkv_m = wqkv.astype(matmul_dtype)
    wo_m = wo.astype(matmul_dtype)
    bo_f = bo.astype(jnp.float32)

    def kernel(x_ref, wqkv_ref, wo_ref, bo_ref, bias_ref, o_ref):
        # One fused QKV projection for all heads & the whole batch (f32 accum).
        qkv = jnp.dot(x_ref[...], wqkv_ref[...],
                      preferred_element_type=jnp.float32)          # (BT, 3*HD) f32
        b_add = bias_ref[...]                                      # (BT, BT) f32

        outs = []
        for h in range(H):                                         # static unroll, H=4
            q = qkv[:, 0 * HD + h * Dh: 0 * HD + (h + 1) * Dh]     # (BT, Dh)
            k = qkv[:, 1 * HD + h * Dh: 1 * HD + (h + 1) * Dh]
            v = qkv[:, 2 * HD + h * Dh: 2 * HD + (h + 1) * Dh]
            # q @ k.T without materializing a transpose (contract last dims).
            s = lax.dot_general(q, k, (((1,), (1,)), ((), ())),
                                preferred_element_type=jnp.float32)  # (BT, BT)
            s = s + b_add
            s = s - jnp.max(s, axis=-1, keepdims=True)
            p = jnp.exp(s)
            p = p / jnp.sum(p, axis=-1, keepdims=True)              # exact reciprocal
            outs.append(jnp.dot(p, v, preferred_element_type=jnp.float32))  # (BT, Dh)

        # Heads are adjacent lanes -> "concat" is cheap lane packing.
        oh = jnp.concatenate(outs, axis=-1)                         # (BT, HD)

        # Single output projection (no per-head matmuls / cross-head reduce).
        out = jnp.dot(oh.astype(wo_ref.dtype), wo_ref[...],
                      preferred_element_type=jnp.float32)           # (BT, C)
        o_ref[...] = (out + bo_ref[...]).astype(o_ref.dtype)

    out2d = pl.pallas_call(
        kernel,
        out_shape=jax.ShapeDtypeStruct((BT, C), jnp.float32),
        in_specs=[
            pl.BlockSpec((BT, C), lambda: (0, 0)),        # x, batch folded into rows
            pl.BlockSpec((C, 3 * HD), lambda: (0, 0)),    # fused Wqkv (scale folded)
            pl.BlockSpec((HD, C), lambda: (0, 0)),        # Wo
            pl.BlockSpec((1, C), lambda: (0, 0)),         # bo
            pl.BlockSpec((BT, BT), lambda: (0, 0)),       # block-diag causal bias
        ],
        out_specs=pl.BlockSpec((BT, C), lambda: (0, 0)),
    )(x2d, wqkv_m, wo_m, bo_f, bias)

    return out2d.reshape(B, T, C)


def reference_mha(x, wq, wk, wv, wo, bo):
    """Pure-JAX reference matching the PyTorch forward (eval mode)."""
    B, T, C = x.shape
    H, _, Dh = wq.shape
    causal = jnp.tril(jnp.ones((T, T), dtype=bool))
    outs = []
    for h in range(H):
        q = x @ wq[h]
        k = x @ wk[h]
        v = x @ wv[h]
        wei = (q @ jnp.swapaxes(k, -2, -1)) * (Dh ** -0.5)
        wei = jnp.where(causal, wei, -jnp.inf)
        wei = jax.nn.softmax(wei, axis=-1)
        outs.append(wei @ v)
    cat = jnp.concatenate(outs, axis=-1)
    return cat @ wo + bo


if __name__ == "__main__":
    B, T, C, H, Dh = 2, block_size, n_embd, num_heads, head_size

    key = jax.random.PRNGKey(0)
    kx, kq, kk, kv, kwo, kbo = jax.random.split(key, 6)

    x = jax.random.normal(kx, (B, T, C), dtype=jnp.float32)

    # Deterministic init: uniform(-1/sqrt(fan_in), 1/sqrt(fan_in)), like nn.Linear default.
    lim_h = 1.0 / (C ** 0.5)
    wq = jax.random.uniform(kq, (H, C, Dh), jnp.float32, -lim_h, lim_h)
    wk = jax.random.uniform(kk, (H, C, Dh), jnp.float32, -lim_h, lim_h)
    wv = jax.random.uniform(kv, (H, C, Dh), jnp.float32, -lim_h, lim_h)
    lim_o = 1.0 / ((H * Dh) ** 0.5)
    wo = jax.random.uniform(kwo, (H * Dh, C), jnp.float32, -lim_o, lim_o)
    bo = jax.random.uniform(kbo, (1, C), jnp.float32, -lim_o, lim_o)

    ref = reference_mha(x, wq, wk, wv, wo, bo)

    # f32 matmul operands: tight check (exact reciprocal, f32 everywhere).
    out = multi_head_attention(x, wq, wk, wv, wo, bo)
    out = jax.block_until_ready(out)
    assert out.shape == (B, T, C)
    assert jnp.allclose(out, ref, atol=1e-4, rtol=1e-4), "f32 kernel mismatch vs reference"

    # bf16 matmul operands (v6e/v7x MXU-native); f32 accumulation + f32 softmax.
    # Looser tolerance reflects bf16 operand rounding only.
    out_bf16 = multi_head_attention(x, wq, wk, wv, wo, bo, matmul_dtype=jnp.bfloat16)
    out_bf16 = jax.block_until_ready(out_bf16)
    assert jnp.allclose(out_bf16, ref, atol=3e-2, rtol=3e-2), "bf16 kernel mismatch vs reference"

    print("KERNEL_OK")
</pallas_src>

<mosaic_0001>
module attributes {stable_mosaic.version = 11 : i64} {
  func.func @kernel(%arg0: memref<16x32xf32, #tpu.memory_space<vmem>>, %arg1: memref<32x96xf32, #tpu.memory_space<vmem>>, %arg2: memref<32x32xf32, #tpu.memory_space<vmem>>, %arg3: memref<1x32xf32, #tpu.memory_space<vmem>>, %arg4: memref<16x16xf32, #tpu.memory_space<vmem>>, %arg5: memref<16x32xf32, #tpu.memory_space<vmem>>) attributes {dimension_semantics = [], scalar_prefetch = 0 : i64, scratch_operands = 0 : i64, tpu.core_type = #tpu.core_type<tc>} {
    %c0 = arith.constant 0 : index
    %c0_0 = arith.constant 0 : index
    %0 = vector.load %arg0[%c0, %c0_0] : memref<16x32xf32, #tpu.memory_space<vmem>>, vector<16x32xf32>
    %c0_1 = arith.constant 0 : index
    %c0_2 = arith.constant 0 : index
    %1 = vector.load %arg1[%c0_1, %c0_2] : memref<32x96xf32, #tpu.memory_space<vmem>>, vector<32x96xf32>
    %cst = arith.constant dense<0.000000e+00> : vector<16x96xf32>
    %2 = tpu.matmul %0, %1, %cst {dimension_numbers = #tpu.dot_dimension_numbers<[1], [0], [0], [1], [0, 0, 1, 1], [], []>} : vector<16x32xf32>, vector<32x96xf32>, vector<16x96xf32> -> vector<16x96xf32>
    %c0_3 = arith.constant 0 : index
    %c0_4 = arith.constant 0 : index
    %3 = vector.load %arg4[%c0_3, %c0_4] : memref<16x16xf32, #tpu.memory_space<vmem>>, vector<16x16xf32>
    %4 = vector.extract_strided_slice %2 {offsets = [0, 0], sizes = [16, 8], strides = [1, 1]} : vector<16x96xf32> to vector<16x8xf32>
    %5 = vector.extract_strided_slice %2 {offsets = [0, 32], sizes = [16, 8], strides = [1, 1]} : vector<16x96xf32> to vector<16x8xf32>
    %6 = vector.extract_strided_slice %2 {offsets = [0, 64], sizes = [16, 8], strides = [1, 1]} : vector<16x96xf32> to vector<16x8xf32>
    %cst_5 = arith.constant dense<0.000000e+00> : vector<16x16xf32>
    %7 = tpu.matmul %4, %5, %cst_5 {dimension_numbers = #tpu.dot_dimension_numbers<[1], [1], [0], [0], [0, 0, 1, 0], [], []>} : vector<16x8xf32>, vector<16x8xf32>, vector<16x16xf32> -> vector<16x16xf32>
    %8 = arith.addf %7, %3 : vector<16x16xf32>
    %cst_6 = arith.constant dense<0xFF800000> : vector<16xf32>
    %9 = vector.multi_reduction <maximumf>, %8, %cst_6 [1] : vector<16x16xf32> to vector<16xf32>
    %10 = vector.shape_cast %9 : vector<16xf32> to vector<16x1xf32>
    %11 = vector.broadcast %10 : vector<16x1xf32> to vector<16x16xf32>
    %12 = arith.subf %8, %11 : vector<16x16xf32>
    %13 = math.exp %12 : vector<16x16xf32>
    %cst_7 = arith.constant dense<0.000000e+00> : vector<16xf32>
    %14 = vector.multi_reduction <add>, %13, %cst_7 [1] : vector<16x16xf32> to vector<16xf32>
    %15 = vector.shape_cast %14 : vector<16xf32> to vector<16x1xf32>
    %16 = vector.broadcast %15 : vector<16x1xf32> to vector<16x16xf32>
    %17 = arith.divf %13, %16 : vector<16x16xf32>
    %cst_8 = arith.constant dense<0.000000e+00> : vector<16x8xf32>
    %18 = tpu.matmul %17, %6, %cst_8 {dimension_numbers = #tpu.dot_dimension_numbers<[1], [0], [0], [1], [0, 0, 1, 1], [], []>} : vector<16x16xf32>, vector<16x8xf32>, vector<16x8xf32> -> vector<16x8xf32>
    %19 = vector.extract_strided_slice %2 {offsets = [0, 8], sizes = [16, 8], strides = [1, 1]} : vector<16x96xf32> to vector<16x8xf32>
    %20 = vector.extract_strided_slice %2 {offsets = [0, 40], sizes = [16, 8], strides = [1, 1]} : vector<16x96xf32> to vector<16x8xf32>
    %21 = vector.extract_strided_slice %2 {offsets = [0, 72], sizes = [16, 8], strides = [1, 1]} : vector<16x96xf32> to vector<16x8xf32>
    %cst_9 = arith.constant dense<0.000000e+00> : vector<16x16xf32>
    %22 = tpu.matmul %19, %20, %cst_9 {dimension_numbers = #tpu.dot_dimension_numbers<[1], [1], [0], [0], [0, 0, 1, 0], [], []>} : vector<16x8xf32>, vector<16x8xf32>, vector<16x16xf32> -> vector<16x16xf32>
    %23 = arith.addf %22, %3 : vector<16x16xf32>
    %cst_10 = arith.constant dense<0xFF800000> : vector<16xf32>
    %24 = vector.multi_reduction <maximumf>, %23, %cst_10 [1] : vector<16x16xf32> to vector<16xf32>
    %25 = vector.shape_cast %24 : vector<16xf32> to vector<16x1xf32>
    %26 = vector.broadcast %25 : vector<16x1xf32> to vector<16x16xf32>
    %27 = arith.subf %23, %26 : vector<16x16xf32>
    %28 = math.exp %27 : vector<16x16xf32>
    %cst_11 = arith.constant dense<0.000000e+00> : vector<16xf32>
    %29 = vector.multi_reduction <add>, %28, %cst_11 [1] : vector<16x16xf32> to vector<16xf32>
    %30 = vector.shape_cast %29 : vector<16xf32> to vector<16x1xf32>
    %31 = vector.broadcast %30 : vector<16x1xf32> to vector<16x16xf32>
    %32 = arith.divf %28, %31 : vector<16x16xf32>
    %cst_12 = arith.constant dense<0.000000e+00> : vector<16x8xf32>
    %33 = tpu.matmul %32, %21, %cst_12 {dimension_numbers = #tpu.dot_dimension_numbers<[1], [0], [0], [1], [0, 0, 1, 1], [], []>} : vector<16x16xf32>, vector<16x8xf32>, vector<16x8xf32> -> vector<16x8xf32>
    %34 = vector.extract_strided_slice %2 {offsets = [0, 16], sizes = [16, 8], strides = [1, 1]} : vector<16x96xf32> to vector<16x8xf32>
    %35 = vector.extract_strided_slice %2 {offsets = [0, 48], sizes = [16, 8], strides = [1, 1]} : vector<16x96xf32> to vector<16x8xf32>
    %36 = vector.extract_strided_slice %2 {offsets = [0, 80], sizes = [16, 8], strides = [1, 1]} : vector<16x96xf32> to vector<16x8xf32>
    %cst_13 = arith.constant dense<0.000000e+00> : vector<16x16xf32>
    %37 = tpu.matmul %34, %35, %cst_13 {dimension_numbers = #tpu.dot_dimension_numbers<[1], [1], [0], [0], [0, 0, 1, 0], [], []>} : vector<16x8xf32>, vector<16x8xf32>, vector<16x16xf32> -> vector<16x16xf32>
    %38 = arith.addf %37, %3 : vector<16x16xf32>
    %cst_14 = arith.constant dense<0xFF800000> : vector<16xf32>
    %39 = vector.multi_reduction <maximumf>, %38, %cst_14 [1] : vector<16x16xf32> to vector<16xf32>
    %40 = vector.shape_cast %39 : vector<16xf32> to vector<16x1xf32>
    %41 = vector.broadcast %40 : vector<16x1xf32> to vector<16x16xf32>
    %42 = arith.subf %38, %41 : vector<16x16xf32>
    %43 = math.exp %42 : vector<16x16xf32>
    %cst_15 = arith.constant dense<0.000000e+00> : vector<16xf32>
    %44 = vector.multi_reduction <add>, %43, %cst_15 [1] : vector<16x16xf32> to vector<16xf32>
    %45 = vector.shape_cast %44 : vector<16xf32> to vector<16x1xf32>
    %46 = vector.broadcast %45 : vector<16x1xf32> to vector<16x16xf32>
    %47 = arith.divf %43, %46 : vector<16x16xf32>
    %cst_16 = arith.constant dense<0.000000e+00> : vector<16x8xf32>
    %48 = tpu.matmul %47, %36, %cst_16 {dimension_numbers = #tpu.dot_dimension_numbers<[1], [0], [0], [1], [0, 0, 1, 1], [], []>} : vector<16x16xf32>, vector<16x8xf32>, vector<16x8xf32> -> vector<16x8xf32>
    %49 = vector.extract_strided_slice %2 {offsets = [0, 24], sizes = [16, 8], strides = [1, 1]} : vector<16x96xf32> to vector<16x8xf32>
    %50 = vector.extract_strided_slice %2 {offsets = [0, 56], sizes = [16, 8], strides = [1, 1]} : vector<16x96xf32> to vector<16x8xf32>
    %51 = vector.extract_strided_slice %2 {offsets = [0, 88], sizes = [16, 8], strides = [1, 1]} : vector<16x96xf32> to vector<16x8xf32>
    %cst_17 = arith.constant dense<0.000000e+00> : vector<16x16xf32>
    %52 = tpu.matmul %49, %50, %cst_17 {dimension_numbers = #tpu.dot_dimension_numbers<[1], [1], [0], [0], [0, 0, 1, 0], [], []>} : vector<16x8xf32>, vector<16x8xf32>, vector<16x16xf32> -> vector<16x16xf32>
    %53 = arith.addf %52, %3 : vector<16x16xf32>
    %cst_18 = arith.constant dense<0xFF800000> : vector<16xf32>
    %54 = vector.multi_reduction <maximumf>, %53, %cst_18 [1] : vector<16x16xf32> to vector<16xf32>
    %55 = vector.shape_cast %54 : vector<16xf32> to vector<16x1xf32>
    %56 = vector.broadcast %55 : vector<16x1xf32> to vector<16x16xf32>
    %57 = arith.subf %53, %56 : vector<16x16xf32>
    %58 = math.exp %57 : vector<16x16xf32>
    %cst_19 = arith.constant dense<0.000000e+00> : vector<16xf32>
    %59 = vector.multi_reduction <add>, %58, %cst_19 [1] : vector<16x16xf32> to vector<16xf32>
    %60 = vector.shape_cast %59 : vector<16xf32> to vector<16x1xf32>
    %61 = vector.broadcast %60 : vector<16x1xf32> to vector<16x16xf32>
    %62 = arith.divf %58, %61 : vector<16x16xf32>
    %cst_20 = arith.constant dense<0.000000e+00> : vector<16x8xf32>
    %63 = tpu.matmul %62, %51, %cst_20 {dimension_numbers = #tpu.dot_dimension_numbers<[1], [0], [0], [1], [0, 0, 1, 1], [], []>} : vector<16x16xf32>, vector<16x8xf32>, vector<16x8xf32> -> vector<16x8xf32>
    %64 = tpu.concatenate %18, %33, %48, %63 in 1 : vector<16x8xf32>, vector<16x8xf32>, vector<16x8xf32>, vector<16x8xf32> -> vector<16x32xf32>
    %c0_21 = arith.constant 0 : index
    %c0_22 = arith.constant 0 : index
    %65 = vector.load %arg2[%c0_21, %c0_22] : memref<32x32xf32, #tpu.memory_space<vmem>>, vector<32x32xf32>
    %cst_23 = arith.constant dense<0.000000e+00> : vector<16x32xf32>
    %66 = tpu.matmul %64, %65, %cst_23 {dimension_numbers = #tpu.dot_dimension_numbers<[1], [0], [0], [1], [0, 0, 1, 1], [], []>} : vector<16x32xf32>, vector<32x32xf32>, vector<16x32xf32> -> vector<16x32xf32>
    %c0_24 = arith.constant 0 : index
    %c0_25 = arith.constant 0 : index
    %67 = vector.load %arg3[%c0_24, %c0_25] : memref<1x32xf32, #tpu.memory_space<vmem>>, vector<1x32xf32>
    %68 = vector.broadcast %67 : vector<1x32xf32> to vector<16x32xf32>
    %69 = arith.addf %66, %68 : vector<16x32xf32>
    %c0_26 = arith.constant 0 : index
    %c0_27 = arith.constant 0 : index
    %70 = vector.load %arg5[%c0_26, %c0_27] : memref<16x32xf32, #tpu.memory_space<vmem>>, vector<16x32xf32>
    tpu.vector_store %arg5[%c0_26, %c0_27], %69 {strides = array<i32>} : memref<16x32xf32, #tpu.memory_space<vmem>>, vector<16x32xf32>,
    return
  }
}

</mosaic_0001>

<llo_original>
// kernel: tpu_custom_call.1
$region0: #{tpu_custom_call.1}
  #allocation0 [shape = 'u32[]', space=smem, size = 0x4, offset = 0x4, fixed_abs, tag = 'smem constant byte address 0x4 - core index']
  #allocation1 [shape = 'u32[144,128]{1,0:T(1,128)}', space=vmem, size = 0x12000, scoped, tag = 'internal scratch']
  %s0 = inlined_call_operand.hbm [shape: f32[16,32], index: 0, kind: input, shape index: {}]
  %s1 = inlined_call_operand.hbm [shape: f32[32,96], index: 1, kind: input, shape index: {}]
  %s2 = inlined_call_operand.hbm [shape: f32[32,32], index: 2, kind: input, shape index: {}]
  %s3 = inlined_call_operand.vmem [shape: f32[1,32], index: 3, kind: input, shape index: {}]
  %s4 = inlined_call_operand.hbm [shape: f32[16,16], index: 4, kind: input, shape index: {}]
  %s5 = inlined_call_operand.hbm [shape: f32[16,32], index: 5, kind: output, shape index: {}]
  %s6 = sld [smem:[#allocation0]]
  $region46: #{tpu_custom_call.1} parent=0
    _
  %s8 = ssub.s32 1, %s6
  %s9 = scalar_select 0, %s8, %s6
  $region1: #{tpu_custom_call.1} parent=0
    #allocation2 [shape = 'u8[8192]{0}', space=vmem, size = 0x2000, scoped, tag = 'input window, operand 0, single buffered']
    #allocation3 [shape = 's32[1]{0}', space=sflag, size = 0x4, scoped, tag = 'scoped memory for tpu_custom_call.1']
    #allocation4 [shape = 's32[1]{0}', space=sflag, size = 0x4, scoped, tag = 'scoped memory for tpu_custom_call.1']
    #allocation5 [shape = 'u8[16384]{0}', space=vmem, size = 0x4000, scoped, tag = 'input window, operand 1, single buffered']
    #allocation6 [shape = 's32[1]{0}', space=sflag, size = 0x4, scoped, tag = 'scoped memory for tpu_custom_call.1']
    #allocation7 [shape = 'u8[16384]{0}', space=vmem, size = 0x4000, scoped, tag = 'input window, operand 2, single buffered']
    #allocation8 [shape = 'u8[8192]{0}', space=vmem, size = 0x2000, scoped, tag = 'input window, operand 4, single buffered']
    #allocation9 [shape = 's32[1]{0}', space=sflag, size = 0x4, scoped, tag = 'scoped memory for tpu_custom_call.1']
    #allocation10 [shape = 'u8[8192]{0}', space=vmem, size = 0x2000, scoped, tag = 'output window, operand 0, single buffered']
    %10 = vsyncpa [#allocation3], 0
    %11 = vsyncpa [#allocation6], 0
    %12 = vsyncpa [#allocation9], 0
    %13 = vsyncpa [#allocation4], 0
    // Predicated region
    $region2: #{tpu_custom_call.1} parent=1 // pred_check
      _
    $region3: #{tpu_custom_call.1} parent=1 // pred_check_branch
      %15 = sbr.rel (0) target = $region5
    $region4: #{tpu_custom_call.1} parent=1 // pred_region
      %s17 = ssub.s32 256, 256
      %18 = vsyncadd [#allocation3], %s17
      %s19 = sshll.u32 [#allocation2], 4
      %s20 = int_to_ptr.vmem [resolvable:$true] %s19
      %25 = dma.hbm_to_vmem [thread:$0]  %s0, 256, %s20, [#allocation3], 128, 128, 8
    $region5: #{tpu_custom_call.1} parent=1 // pred_fallthru
      _
    // Predicated region
    $region6: #{tpu_custom_call.1} parent=1 // pred_check
      _
    $region7: #{tpu_custom_call.1} parent=1 // pred_check_branch
      %27 = sbr.rel (0) target = $region9
    $region8: #{tpu_custom_call.1} parent=1 // pred_region
      %s29 = ssub.s32 512, 512
      %30 = vsyncadd [#allocation6], %s29
      %s31 = sshll.u32 [#allocation5], 4
      %s32 = int_to_ptr.vmem [resolvable:$true] %s31
      %37 = dma.hbm_to_vmem [thread:$0]  %s1, 512, %s32, [#allocation6], 128, 128, 8
    $region9: #{tpu_custom_call.1} parent=1 // pred_fallthru
      _
    // Predicated region
    $region10: #{tpu_custom_call.1} parent=1 // pred_check
      _
    $region11: #{tpu_custom_call.1} parent=1 // pred_check_branch
      %39 = sbr.rel (0) target = $region13
    $region12: #{tpu_custom_call.1} parent=1 // pred_region
      %s41 = ssub.s32 512, 512
      %42 = vsyncadd [#allocation6], %s41
      %s43 = sshll.u32 [#allocation7], 4
      %s44 = int_to_ptr.vmem [resolvable:$true] %s43
      %49 = dma.hbm_to_vmem [thread:$0]  %s2, 512, %s44, [#allocation6], 128, 128, 8
    $region13: #{tpu_custom_call.1} parent=1 // pred_fallthru
      _
    // Predicated region
    $region14: #{tpu_custom_call.1} parent=1 // pred_check
      _
    $region15: #{tpu_custom_call.1} parent=1 // pred_check_branch
      %51 = sbr.rel (0) target = $region17
    $region16: #{tpu_custom_call.1} parent=1 // pred_region
      _
    $region17: #{tpu_custom_call.1} parent=1 // pred_fallthru
      _
    // Predicated region
    $region18: #{tpu_custom_call.1} parent=1 // pred_check
      _
    $region19: #{tpu_custom_call.1} parent=1 // pred_check_branch
      %53 = sbr.rel (0) target = $region21
    $region20: #{tpu_custom_call.1} parent=1 // pred_region
      %s55 = ssub.s32 256, 256
      %56 = vsyncadd [#allocation9], %s55
      %s57 = sshll.u32 [#allocation8], 4
      %s58 = int_to_ptr.vmem [resolvable:$true] %s57
      %63 = dma.hbm_to_vmem [thread:$0]  %s4, 256, %s58, [#allocation9], 128, 128, 8
    $region21: #{tpu_custom_call.1} parent=1 // pred_fallthru
      _
    // Predicated region
    $region22: #{tpu_custom_call.1} parent=1 // pred_check
      _
    $region23: #{tpu_custom_call.1} parent=1 // pred_check_branch
      %65 = sbr.rel (0) target = $region25
    $region24: #{tpu_custom_call.1} parent=1 // pred_region
      %66 = dma.done [#allocation3], 256
    $region25: #{tpu_custom_call.1} parent=1 // pred_fallthru
      _
    // Predicated region
    $region26: #{tpu_custom_call.1} parent=1 // pred_check
      _
    $region27: #{tpu_custom_call.1} parent=1 // pred_check_branch
      %68 = sbr.rel (0) target = $region29
    $region28: #{tpu_custom_call.1} parent=1 // pred_region
      %69 = dma.done [#allocation6], 512
    $region29: #{tpu_custom_call.1} parent=1 // pred_fallthru
      _
    // Predicated region
    $region30: #{tpu_custom_call.1} parent=1 // pred_check
      _
    $region31: #{tpu_custom_call.1} parent=1 // pred_check_branch
      %71 = sbr.rel (0) target = $region33
    $region32: #{tpu_custom_call.1} parent=1 // pred_region
      %72 = dma.done [#allocation6], 512
    $region33: #{tpu_custom_call.1} parent=1 // pred_fallthru
      _
    // Predicated region
    $region34: #{tpu_custom_call.1} parent=1 // pred_check
      _
    $region35: #{tpu_custom_call.1} parent=1 // pred_check_branch
      %74 = sbr.rel (0) target = $region37
    $region36: #{tpu_custom_call.1} parent=1 // pred_region
      %75 = dma.done [#allocation9], 256
    $region37: #{tpu_custom_call.1} parent=1 // pred_fallthru
      _
    %v76 = vld [vmem:[#allocation2] sm:$0xff]
    %v77 = vld [vmem:[#allocation2 + $0x8] sm:$0xff]
    %v78 = vld [vmem:[#allocation5] sm:$0xff]
    %v79 = vld [vmem:[#allocation5 + $0x8] sm:$0xff]
    %v80 = vld [vmem:[#allocation5 + $0x10] sm:$0xff]
    %v81 = vld [vmem:[#allocation5 + $0x18] sm:$0xff]
    %vm82 = vcmask 261120
    %v84 = vsel %vm82, %v76, 0
    %v87 = vsel %vm82, %v77, 0
    %89 = vmatprep.subr.mxu0 0.0
    %90 = vmatpush1.msra.mxu0 0.0
    %91 = vmatprep.subr.mxu0 0.0
    %92 = vmatpush1.msra.mxu0 0.0
    %93 = vmatprep.subr.mxu0 0.0
    %94 = vmatpush1.msra.mxu0 0.0
    %95 = vmatprep.subr.mxu0 0.0
    %96 = vmatpush1.msra.mxu0 0.0
    %97 = vmatprep.subr.mxu0 0.0
    %98 = vmatpush1.msra.mxu0 0.0
    %99 = vmatprep.subr.mxu0 0.0
    %100 = vmatpush1.msra.mxu0 0.0
    %101 = vmatprep.subr.mxu0 0.0
    %102 = vmatpush1.msra.mxu0 0.0
    %103 = vmatprep.subr.mxu0 0.0
    %104 = vmatpush1.msra.mxu0 0.0
    %105 = vmatprep.subr.mxu0 0.0
    %106 = vmatpush1.msra.mxu0 0.0
    %107 = vmatprep.subr.mxu0 0.0
    %108 = vmatpush1.msra.mxu0 0.0
    %109 = vmatprep.subr.mxu0 0.0
    %110 = vmatpush1.msra.mxu0 0.0
    %111 = vmatprep.subr.mxu0 0.0
    %112 = vmatpush1.msra.mxu0 0.0
    %113 = vmatprep.subr.mxu0 0.0
    %114 = vmatpush1.msra.mxu0 %v81
    %115 = vmatprep.subr.mxu0 0.0
    %116 = vmatpush1.msra.mxu0 %v80
    %117 = vmatprep.subr.mxu0 0.0
    %118 = vmatpush1.msra.mxu0 %v79
    %119 = vmatprep.subr.mxu0 0.0
    %120 = vmatpush1.msra.mxu0 %v78
    %121 = vmatprep.subr.mxu0 0.0
    %122 = vmatpush2.msra.mxu0 0.0
    %123 = vmatprep.subr.mxu0 0.0
    %124 = vmatpush2.msra.mxu0 0.0
    %125 = vmatprep.subr.mxu0 0.0
    %126 = vmatpush2.msra.mxu0 0.0
    %127 = vmatprep.subr.mxu0 0.0
    %128 = vmatpush2.msra.mxu0 0.0
    %129 = vmatprep.subr.mxu0 0.0
    %130 = vmatpush2.msra.mxu0 0.0
    %131 = vmatprep.subr.mxu0 0.0
    %132 = vmatpush2.msra.mxu0 0.0
    %133 = vmatprep.subr.mxu0 0.0
    %134 = vmatpush2.msra.mxu0 0.0
    %135 = vmatprep.subr.mxu0 0.0
    %136 = vmatpush2.msra.mxu0 0.0
    %137 = vmatprep.subr.mxu0 0.0
    %138 = vmatpush2.msra.mxu0 0.0
    %139 = vmatprep.subr.mxu0 0.0
    %140 = vmatpush2.msra.mxu0 0.0
    %141 = vmatprep.subr.mxu0 0.0
    %142 = vmatpush2.msra.mxu0 0.0
    %143 = vmatprep.subr.mxu0 0.0
    %144 = vmatpush2.msra.mxu0 0.0
    %145 = vmatprep.subr.mxu0 0.0
    %146 = vmatpush2.msra.mxu0 0.0
    %147 = vmatprep.subr.mxu0 0.0
    %148 = vmatpush2.msra.mxu0 0.0
    %149 = vmatprep.subr.mxu0 0.0
    %150 = vmatpush2.msra.mxu0 0.0
    %151 = vmatprep.subr.mxu0 0.0
    %152 = vmatpush2.msra.mxu0 0.0
    %153 = vmatprep.mubr.f32.mxu0 0.0
    %154 = vmatmul.mubr.f32.gmra.mxu0 %v84
    %v155 = vpop.f32.mrf.mxu0
    %v156 = vadd.f32 0.0, %v155
    %v157 = vpop.f32.mrf.mxu0
    %158 = vmatprep.mubr.f32.mxu0 0.0
    %159 = vmatmul.mubr.f32.gmra.mxu0 %v87
    %v160 = vpop.f32.mrf.mxu0
    %v161 = vadd.f32 0.0, %v160
    %v162 = vpop.f32.mrf.mxu0
    %163 = vdwg.mxu0
    %v164 = vld [vmem:[#allocation8] sm:$0xff]
    %v165 = vld [vmem:[#allocation8 + $0x8] sm:$0xff]
    %168 = vrot.lane.b32.xlu0 %v156, 96
    %v169 = vpop.permute.xlu0 %168
    %170 = vrot.lane.b32.xlu0 %v161, 96
    %v171 = vpop.permute.xlu0 %170
    %vm172 = vcmask 64512
    %v173 = vsel %vm172, %v156, 0
    %v175 = vsel %vm172, %v161, 0
    %v177 = vsel %vm172, %v169, 0
    %v179 = vsel %vm172, %v171, 0
    %181 = vmatprep.subr.mxu0 0.0
    %182 = vmatpush1.xpose.msra.mxu0 0.0
    %183 = vmatprep.subr.mxu0 0.0
    %184 = vmatpush1.xpose.msra.mxu0 0.0
    %185 = vmatprep.subr.mxu0 0.0
    %186 = vmatpush1.xpose.msra.mxu0 0.0
    %187 = vmatprep.subr.mxu0 0.0
    %188 = vmatpush1.xpose.msra.mxu0 0.0
    %189 = vmatprep.subr.mxu0 0.0
    %190 = vmatpush1.xpose.msra.mxu0 0.0
    %191 = vmatprep.subr.mxu0 0.0
    %192 = vmatpush1.xpose.msra.mxu0 0.0
    %193 = vmatprep.subr.mxu0 0.0
    %194 = vmatpush1.xpose.msra.mxu0 0.0
    %195 = vmatprep.subr.mxu0 0.0
    %196 = vmatpush1.xpose.msra.mxu0 0.0
    %197 = vmatprep.subr.mxu0 0.0
    %198 = vmatpush1.xpose.msra.mxu0 0.0
    %199 = vmatprep.subr.mxu0 0.0
    %200 = vmatpush1.xpose.msra.mxu0 0.0
    %201 = vmatprep.subr.mxu0 0.0
    %202 = vmatpush1.xpose.msra.mxu0 0.0
    %203 = vmatprep.subr.mxu0 0.0
    %204 = vmatpush1.xpose.msra.mxu0 0.0
    %205 = vmatprep.subr.mxu0 0.0
    %206 = vmatpush1.xpose.msra.mxu0 0.0
    %207 = vmatprep.subr.mxu0 0.0
    %208 = vmatpush1.xpose.msra.mxu0 0.0
    %209 = vmatprep.subr.mxu0 0.0
    %210 = vmatpush1.xpose.msra.mxu0 %v179
    %211 = vmatprep.subr.mxu0 0.0
    %212 = vmatpush1.xpose.msra.mxu0 %v177
    %213 = vmatprep.subr.mxu0 0.0
    %214 = vmatpush2.xpose.msra.mxu0 0.0
    %215 = vmatprep.subr.mxu0 0.0
    %216 = vmatpush2.xpose.msra.mxu0 0.0
    %217 = vmatprep.subr.mxu0 0.0
    %218 = vmatpush2.xpose.msra.mxu0 0.0
    %219 = vmatprep.subr.mxu0 0.0
    %220 = vmatpush2.xpose.msra.mxu0 0.0
    %221 = vmatprep.subr.mxu0 0.0
    %222 = vmatpush2.xpose.msra.mxu0 0.0
    %223 = vmatprep.subr.mxu0 0.0
    %224 = vmatpush2.xpose.msra.mxu0 0.0
    %225 = vmatprep.subr.mxu0 0.0
    %226 = vmatpush2.xpose.msra.mxu0 0.0
    %227 = vmatprep.subr.mxu0 0.0
    %228 = vmatpush2.xpose.msra.mxu0 0.0
    %229 = vmatprep.subr.mxu0 0.0
    %230 = vmatpush2.xpose.msra.mxu0 0.0
    %231 = vmatprep.subr.mxu0 0.0
    %232 = vmatpush2.xpose.msra.mxu0 0.0
    %233 = vmatprep.subr.mxu0 0.0
    %234 = vmatpush2.xpose.msra.mxu0 0.0
    %235 = vmatprep.subr.mxu0 0.0
    %236 = vmatpush2.xpose.msra.mxu0 0.0
    %237 = vmatprep.subr.mxu0 0.0
    %238 = vmatpush2.xpose.msra.mxu0 0.0
    %239 = vmatprep.subr.mxu0 0.0
    %240 = vmatpush2.xpose.msra.mxu0 0.0
    %241 = vmatprep.subr.mxu0 0.0
    %242 = vmatpush2.xpose.msra.mxu0 0.0
    %243 = vmatprep.subr.mxu0 0.0
    %244 = vmatpush2.xpose.msra.mxu0 0.0
    %245 = vmatprep.mubr.f32.mxu0 0.0
    %246 = vmatmul.mubr.f32.gmra.mxu0 %v173
    %v247 = vpop.f32.mrf.mxu0
    %v248 = vadd.f32 %v164, %v247
    %v249 = vpop.f32.mrf.mxu0
    %250 = vmatprep.mubr.f32.mxu0 0.0
    %251 = vmatmul.mubr.f32.gmra.mxu0 %v175
    %v252 = vpop.f32.mrf.mxu0
    %v253 = vadd.f32 %v165, %v252
    %v254 = vpop.f32.mrf.mxu0
    %255 = vdwg.mxu0
    %vm256 = vcmask 130048
    %v257 = vsel %vm256, %v248, -inf
    %258 = vmax.xlane.f32.xlu0 %v257
    %v259 = vpop.xlane.xlu0 %258
    %v260 = vsel %vm256, %v253, -inf
    %261 = vmax.xlane.f32.xlu0 %v260
    %v262 = vpop.xlane.xlu0 %261
    %v263 = vsub.f32 %v248, %v259
    %v264 = vsub.f32 %v253, %v262
    %v265 = vmul.f32 %v263, 1.442695
    %v266 = vpow.pop %v265
    %v267 = vmul.f32 %v264, 1.442695
    %v268 = vpow.pop %v267
    %v269 = vsel %vm256, %v266, 0.0
    %270 = vadd.xlane.f32.xlu0 %v269
    %v271 = vpop.xlane.xlu0 %270
    %v272 = vsel %vm256, %v268, 0.0
    %273 = vadd.xlane.f32.xlu0 %v272
    %v274 = vpop.xlane.xlu0 %273
    %v275 = vrcp.pop %v271
    %v276 = vmul.f32 %v266, %v275
    %v277 = vrcp.pop %v274
    %v278 = vmul.f32 %v268, %v277
    %279 = vrot.lane.b32.xlu0 %v156, 64
    %v280 = vpop.permute.xlu0 %279
    %281 = vrot.lane.b32.xlu0 %v161, 64
    %v282 = vpop.permute.xlu0 %281
    %v286 = vsel %vm256, %v276, 0
    %v289 = vsel %vm256, %v278, 0
    %291 = vmatprep.subr.mxu0 0.0
    %292 = vmatpush1.msra.mxu0 0.0
    %293 = vmatprep.subr.mxu0 0.0
    %294 = vmatpush1.msra.mxu0 0.0
    %295 = vmatprep.subr.mxu0 0.0
    %296 = vmatpush1.msra.mxu0 0.0
    %297 = vmatprep.subr.mxu0 0.0
    %298 = vmatpush1.msra.mxu0 0.0
    %299 = vmatprep.subr.mxu0 0.0
    %300 = vmatpush1.msra.mxu0 0.0
    %301 = vmatprep.subr.mxu0 0.0
    %302 = vmatpush1.msra.mxu0 0.0
    %303 = vmatprep.subr.mxu0 0.0
    %304 = vmatpush1.msra.mxu0 0.0
    %305 = vmatprep.subr.mxu0 0.0
    %306 = vmatpush1.msra.mxu0 0.0
    %307 = vmatprep.subr.mxu0 0.0
    %308 = vmatpush1.msra.mxu0 0.0
    %309 = vmatprep.subr.mxu0 0.0
    %310 = vmatpush1.msra.mxu0 0.0
    %311 = vmatprep.subr.mxu0 0.0
    %312 = vmatpush1.msra.mxu0 0.0
    %313 = vmatprep.subr.mxu0 0.0
    %314 = vmatpush1.msra.mxu0 0.0
    %315 = vmatprep.subr.mxu0 0.0
    %316 = vmatpush1.msra.mxu0 0.0
    %317 = vmatprep.subr.mxu0 0.0
    %318 = vmatpush1.msra.mxu0 0.0
    %319 = vmatprep.subr.mxu0 0.0
    %320 = vmatpush1.msra.mxu0 %v282
    %321 = vmatprep.subr.mxu0 0.0
    %322 = vmatpush1.msra.mxu0 %v280
    %323 = vmatprep.subr.mxu0 0.0
    %324 = vmatpush2.msra.mxu0 0.0
    %325 = vmatprep.subr.mxu0 0.0
    %326 = vmatpush2.msra.mxu0 0.0
    %327 = vmatprep.subr.mxu0 0.0
    %328 = vmatpush2.msra.mxu0 0.0
    %329 = vmatprep.subr.mxu0 0.0
    %330 = vmatpush2.msra.mxu0 0.0
    %331 = vmatprep.subr.mxu0 0.0
    %332 = vmatpush2.msra.mxu0 0.0
    %333 = vmatprep.subr.mxu0 0.0
    %334 = vmatpush2.msra.mxu0 0.0
    %335 = vmatprep.subr.mxu0 0.0
    %336 = vmatpush2.msra.mxu0 0.0
    %337 = vmatprep.subr.mxu0 0.0
    %338 = vmatpush2.msra.mxu0 0.0
    %339 = vmatprep.subr.mxu0 0.0
    %340 = vmatpush2.msra.mxu0 0.0
    %341 = vmatprep.subr.mxu0 0.0
    %342 = vmatpush2.msra.mxu0 0.0
    %343 = vmatprep.subr.mxu0 0.0
    %344 = vmatpush2.msra.mxu0 0.0
    %345 = vmatprep.subr.mxu0 0.0
    %346 = vmatpush2.msra.mxu0 0.0
    %347 = vmatprep.subr.mxu0 0.0
    %348 = vmatpush2.msra.mxu0 0.0
    %349 = vmatprep.subr.mxu0 0.0
    %350 = vmatpush2.msra.mxu0 0.0
    %351 = vmatprep.subr.mxu0 0.0
    %352 = vmatpush2.msra.mxu0 0.0
    %353 = vmatprep.subr.mxu0 0.0
    %354 = vmatpush2.msra.mxu0 0.0
    %355 = vmatprep.mubr.f32.mxu0 0.0
    %356 = vmatmul.mubr.f32.gmra.mxu0 %v286
    %v357 = vpop.f32.mrf.mxu0
    %v358 = vadd.f32 0.0, %v357
    %v359 = vpop.f32.mrf.mxu0
    %360 = vmatprep.mubr.f32.mxu0 0.0
    %361 = vmatmul.mubr.f32.gmra.mxu0 %v289
    %v362 = vpop.f32.mrf.mxu0
    %v363 = vadd.f32 0.0, %v362
    %v364 = vpop.f32.mrf.mxu0
    %365 = vdwg.mxu0
    %366 = vrot.lane.b32.xlu0 %v156, 120
    %v367 = vpop.permute.xlu0 %366
    %368 = vrot.lane.b32.xlu0 %v161, 120
    %v369 = vpop.permute.xlu0 %368
    %370 = vrot.lane.b32.xlu0 %v156, 88
    %v371 = vpop.permute.xlu0 %370
    %372 = vrot.lane.b32.xlu0 %v161, 88
    %v373 = vpop.permute.xlu0 %372
    %v374 = vsel %vm172, %v367, 0
    %v376 = vsel %vm172, %v369, 0
    %v378 = vsel %vm172, %v371, 0
    %v380 = vsel %vm172, %v373, 0
    %382 = vmatprep.subr.mxu0 0.0
    %383 = vmatpush1.xpose.msra.mxu0 0.0
    %384 = vmatprep.subr.mxu0 0.0
    %385 = vmatpush1.xpose.msra.mxu0 0.0
    %386 = vmatprep.subr.mxu0 0.0
    %387 = vmatpush1.xpose.msra.mxu0 0.0
    %388 = vmatprep.subr.mxu0 0.0
    %389 = vmatpush1.xpose.msra.mxu0 0.0
    %390 = vmatprep.subr.mxu0 0.0
    %391 = vmatpush1.xpose.msra.mxu0 0.0
    %392 = vmatprep.subr.mxu0 0.0
    %393 = vmatpush1.xpose.msra.mxu0 0.0
    %394 = vmatprep.subr.mxu0 0.0
    %395 = vmatpush1.xpose.msra.mxu0 0.0
    %396 = vmatprep.subr.mxu0 0.0
    %397 = vmatpush1.xpose.msra.mxu0 0.0
    %398 = vmatprep.subr.mxu0 0.0
    %399 = vmatpush1.xpose.msra.mxu0 0.0
    %400 = vmatprep.subr.mxu0 0.0
    %401 = vmatpush1.xpose.msra.mxu0 0.0
    %402 = vmatprep.subr.mxu0 0.0
    %403 = vmatpush1.xpose.msra.mxu0 0.0
    %404 = vmatprep.subr.mxu0 0.0
    %405 = vmatpush1.xpose.msra.mxu0 0.0
    %406 = vmatprep.subr.mxu0 0.0
    %407 = vmatpush1.xpose.msra.mxu0 0.0
    %408 = vmatprep.subr.mxu0 0.0
    %409 = vmatpush1.xpose.msra.mxu0 0.0
    %410 = vmatprep.subr.mxu0 0.0
    %411 = vmatpush1.xpose.msra.mxu0 %v380
    %412 = vmatprep.subr.mxu0 0.0
    %413 = vmatpush1.xpose.msra.mxu0 %v378
    %414 = vmatprep.subr.mxu0 0.0
    %415 = vmatpush2.xpose.msra.mxu0 0.0
    %416 = vmatprep.subr.mxu0 0.0
    %417 = vmatpush2.xpose.msra.mxu0 0.0
    %418 = vmatprep.subr.mxu0 0.0
    %419 = vmatpush2.xpose.msra.mxu0 0.0
    %420 = vmatprep.subr.mxu0 0.0
    %421 = vmatpush2.xpose.msra.mxu0 0.0
    %422 = vmatprep.subr.mxu0 0.0
    %423 = vmatpush2.xpose.msra.mxu0 0.0
    %424 = vmatprep.subr.mxu0 0.0
    %425 = vmatpush2.xpose.msra.mxu0 0.0
    %426 = vmatprep.subr.mxu0 0.0
    %427 = vmatpush2.xpose.msra.mxu0 0.0
    %428 = vmatprep.subr.mxu0 0.0
    %429 = vmatpush2.xpose.msra.mxu0 0.0
    %430 = vmatprep.subr.mxu0 0.0
    %431 = vmatpush2.xpose.msra.mxu0 0.0
    %432 = vmatprep.subr.mxu0 0.0
    %433 = vmatpush2.xpose.msra.mxu0 0.0
    %434 = vmatprep.subr.mxu0 0.0
    %435 = vmatpush2.xpose.msra.mxu0 0.0
    %436 = vmatprep.subr.mxu0 0.0
    %437 = vmatpush2.xpose.msra.mxu0 0.0
    %438 = vmatprep.subr.mxu0 0.0
    %439 = vmatpush2.xpose.msra.mxu0 0.0
    %440 = vmatprep.subr.mxu0 0.0
    %441 = vmatpush2.xpose.msra.mxu0 0.0
    %442 = vmatprep.subr.mxu0 0.0
    %443 = vmatpush2.xpose.msra.mxu0 0.0
    %444 = vmatprep.subr.mxu0 0.0
    %445 = vmatpush2.xpose.msra.mxu0 0.0
    %446 = vmatprep.mubr.f32.mxu0 0.0
    %447 = vmatmul.mubr.f32.gmra.mxu0 %v374
    %v448 = vpop.f32.mrf.mxu0
    %v449 = vadd.f32 %v164, %v448
    %v450 = vpop.f32.mrf.mxu0
    %451 = vmatprep.mubr.f32.mxu0 0.0
    %452 = vmatmul.mubr.f32.gmra.mxu0 %v376
    %v453 = vpop.f32.mrf.mxu0
    %v454 = vadd.f32 %v165, %v453
    %v455 = vpop.f32.mrf.mxu0
    %456 = vdwg.mxu0
    %v457 = vsel %vm256, %v449, -inf
    %458 = vmax.xlane.f32.xlu0 %v457
    %v459 = vpop.xlane.xlu0 %458
    %v460 = vsel %vm256, %v454, -inf
    %461 = vmax.xlane.f32.xlu0 %v460
    %v462 = vpop.xlane.xlu0 %461
    %v463 = vsub.f32 %v449, %v459
    %v464 = vsub.f32 %v454, %v462
    %v465 = vmul.f32 %v463, 1.442695
    %v466 = vpow.pop %v465
    %v467 = vmul.f32 %v464, 1.442695
    %v468 = vpow.pop %v467
    %v469 = vsel %vm256, %v466, 0.0
    %470 = vadd.xlane.f32.xlu0 %v469
    %v471 = vpop.xlane.xlu0 %470
    %v472 = vsel %vm256, %v468, 0.0
    %473 = vadd.xlane.f32.xlu0 %v472
    %v474 = vpop.xlane.xlu0 %473
    %v475 = vrcp.pop %v471
    %v476 = vmul.f32 %v466, %v475
    %v477 = vrcp.pop %v474
    %v478 = vmul.f32 %v468, %v477
    %479 = vrot.lane.b32.xlu0 %v156, 56
    %v480 = vpop.permute.xlu0 %479
    %481 = vrot.lane.b32.xlu0 %v161, 56
    %v482 = vpop.permute.xlu0 %481
    %v486 = vsel %vm256, %v476, 0
    %v489 = vsel %vm256, %v478, 0
    %491 = vmatprep.subr.mxu0 0.0
    %492 = vmatpush1.msra.mxu0 0.0
    %493 = vmatprep.subr.mxu0 0.0
    %494 = vmatpush1.msra.mxu0 0.0
    %495 = vmatprep.subr.mxu0 0.0
    %496 = vmatpush1.msra.mxu0 0.0
    %497 = vmatprep.subr.mxu0 0.0
    %498 = vmatpush1.msra.mxu0 0.0
    %499 = vmatprep.subr.mxu0 0.0
    %500 = vmatpush1.msra.mxu0 0.0
    %501 = vmatprep.subr.mxu0 0.0
    %502 = vmatpush1.msra.mxu0 0.0
    %503 = vmatprep.subr.mxu0 0.0
    %504 = vmatpush1.msra.mxu0 0.0
    %505 = vmatprep.subr.mxu0 0.0
    %506 = vmatpush1.msra.mxu0 0.0
    %507 = vmatprep.subr.mxu0 0.0
    %508 = vmatpush1.msra.mxu0 0.0
    %509 = vmatprep.subr.mxu0 0.0
    %510 = vmatpush1.msra.mxu0 0.0
    %511 = vmatprep.subr.mxu0 0.0
    %512 = vmatpush1.msra.mxu0 0.0
    %513 = vmatprep.subr.mxu0 0.0
    %514 = vmatpush1.msra.mxu0 0.0
    %515 = vmatprep.subr.mxu0 0.0
    %516 = vmatpush1.msra.mxu0 0.0
    %517 = vmatprep.subr.mxu0 0.0
    %518 = vmatpush1.msra.mxu0 0.0
    %519 = vmatprep.subr.mxu0 0.0
    %520 = vmatpush1.msra.mxu0 %v482
    %521 = vmatprep.subr.mxu0 0.0
    %522 = vmatpush1.msra.mxu0 %v480
    %523 = vmatprep.subr.mxu0 0.0
    %524 = vmatpush2.msra.mxu0 0.0
    %525 = vmatprep.subr.mxu0 0.0
    %526 = vmatpush2.msra.mxu0 0.0
    %527 = vmatprep.subr.mxu0 0.0
    %528 = vmatpush2.msra.mxu0 0.0
    %529 = vmatprep.subr.mxu0 0.0
    %530 = vmatpush2.msra.mxu0 0.0
    %531 = vmatprep.subr.mxu0 0.0
    %532 = vmatpush2.msra.mxu0 0.0
    %533 = vmatprep.subr.mxu0 0.0
    %534 = vmatpush2.msra.mxu0 0.0
    %535 = vmatprep.subr.mxu0 0.0
    %536 = vmatpush2.msra.mxu0 0.0
    %537 = vmatprep.subr.mxu0 0.0
    %538 = vmatpush2.msra.mxu0 0.0
    %539 = vmatprep.subr.mxu0 0.0
    %540 = vmatpush2.msra.mxu0 0.0
    %541 = vmatprep.subr.mxu0 0.0
    %542 = vmatpush2.msra.mxu0 0.0
    %543 = vmatprep.subr.mxu0 0.0
    %544 = vmatpush2.msra.mxu0 0.0
    %545 = vmatprep.subr.mxu0 0.0
    %546 = vmatpush2.msra.mxu0 0.0
    %547 = vmatprep.subr.mxu0 0.0
    %548 = vmatpush2.msra.mxu0 0.0
    %549 = vmatprep.subr.mxu0 0.0
    %550 = vmatpush2.msra.mxu0 0.0
    %551 = vmatprep.subr.mxu0 0.0
    %552 = vmatpush2.msra.mxu0 0.0
    %553 = vmatprep.subr.mxu0 0.0
    %554 = vmatpush2.msra.mxu0 0.0
    %555 = vmatprep.mubr.f32.mxu0 0.0
    %556 = vmatmul.mubr.f32.gmra.mxu0 %v486
    %v557 = vpop.f32.mrf.mxu0
    %v558 = vadd.f32 0.0, %v557
    %v559 = vpop.f32.mrf.mxu0
    %560 = vmatprep.mubr.f32.mxu0 0.0
    %561 = vmatmul.mubr.f32.gmra.mxu0 %v489
    %v562 = vpop.f32.mrf.mxu0
    %v563 = vadd.f32 0.0, %v562
    %v564 = vpop.f32.mrf.mxu0
    %565 = vdwg.mxu0
    %566 = vrot.lane.b32.xlu0 %v156, 112
    %v567 = vpop.permute.xlu0 %566
    %568 = vrot.lane.b32.xlu0 %v161, 112
    %v569 = vpop.permute.xlu0 %568
    %570 = vrot.lane.b32.xlu0 %v156, 80
    %v571 = vpop.permute.xlu0 %570
    %572 = vrot.lane.b32.xlu0 %v161, 80
    %v573 = vpop.permute.xlu0 %572
    %v574 = vsel %vm172, %v567, 0
    %v576 = vsel %vm172, %v569, 0
    %v578 = vsel %vm172, %v571, 0
    %v580 = vsel %vm172, %v573, 0
    %582 = vmatprep.subr.mxu0 0.0
    %583 = vmatpush1.xpose.msra.mxu0 0.0
    %584 = vmatprep.subr.mxu0 0.0
    %585 = vmatpush1.xpose.msra.mxu0 0.0
    %586 = vmatprep.subr.mxu0 0.0
    %587 = vmatpush1.xpose.msra.mxu0 0.0
    %588 = vmatprep.subr.mxu0 0.0
    %589 = vmatpush1.xpose.msra.mxu0 0.0
    %590 = vmatprep.subr.mxu0 0.0
    %591 = vmatpush1.xpose.msra.mxu0 0.0
    %592 = vmatprep.subr.mxu0 0.0
    %593 = vmatpush1.xpose.msra.mxu0 0.0
    %594 = vmatprep.subr.mxu0 0.0
    %595 = vmatpush1.xpose.msra.mxu0 0.0
    %596 = vmatprep.subr.mxu0 0.0
    %597 = vmatpush1.xpose.msra.mxu0 0.0
    %598 = vmatprep.subr.mxu0 0.0
    %599 = vmatpush1.xpose.msra.mxu0 0.0
    %600 = vmatprep.subr.mxu0 0.0
    %601 = vmatpush1.xpose.msra.mxu0 0.0
    %602 = vmatprep.subr.mxu0 0.0
    %603 = vmatpush1.xpose.msra.mxu0 0.0
    %604 = vmatprep.subr.mxu0 0.0
    %605 = vmatpush1.xpose.msra.mxu0 0.0
    %606 = vmatprep.subr.mxu0 0.0
    %607 = vmatpush1.xpose.msra.mxu0 0.0
    %608 = vmatprep.subr.mxu0 0.0
    %609 = vmatpush1.xpose.msra.mxu0 0.0
    %610 = vmatprep.subr.mxu0 0.0
    %611 = vmatpush1.xpose.msra.mxu0 %v580
    %612 = vmatprep.subr.mxu0 0.0
    %613 = vmatpush1.xpose.msra.mxu0 %v578
    %614 = vmatprep.subr.mxu0 0.0
    %615 = vmatpush2.xpose.msra.mxu0 0.0
    %616 = vmatprep.subr.mxu0 0.0
    %617 = vmatpush2.xpose.msra.mxu0 0.0
    %618 = vmatprep.subr.mxu0 0.0
    %619 = vmatpush2.xpose.msra.mxu0 0.0
    %620 = vmatprep.subr.mxu0 0.0
    %621 = vmatpush2.xpose.msra.mxu0 0.0
    %622 = vmatprep.subr.mxu0 0.0
    %623 = vmatpush2.xpose.msra.mxu0 0.0
    %624 = vmatprep.subr.mxu0 0.0
    %625 = vmatpush2.xpose.msra.mxu0 0.0
    %626 = vmatprep.subr.mxu0 0.0
    %627 = vmatpush2.xpose.msra.mxu0 0.0
    %628 = vmatprep.subr.mxu0 0.0
    %629 = vmatpush2.xpose.msra.mxu0 0.0
    %630 = vmatprep.subr.mxu0 0.0
    %631 = vmatpush2.xpose.msra.mxu0 0.0
    %632 = vmatprep.subr.mxu0 0.0
    %633 = vmatpush2.xpose.msra.mxu0 0.0
    %634 = vmatprep.subr.mxu0 0.0
    %635 = vmatpush2.xpose.msra.mxu0 0.0
    %636 = vmatprep.subr.mxu0 0.0
    %637 = vmatpush2.xpose.msra.mxu0 0.0
    %638 = vmatprep.subr.mxu0 0.0
    %639 = vmatpush2.xpose.msra.mxu0 0.0
    %640 = vmatprep.subr.mxu0 0.0
    %641 = vmatpush2.xpose.msra.mxu0 0.0
    %642 = vmatprep.subr.mxu0 0.0
    %643 = vmatpush2.xpose.msra.mxu0 0.0
    %644 = vmatprep.subr.mxu0 0.0
    %645 = vmatpush2.xpose.msra.mxu0 0.0
    %646 = vmatprep.mubr.f32.mxu0 0.0
    %647 = vmatmul.mubr.f32.gmra.mxu0 %v574
    %v648 = vpop.f32.mrf.mxu0
    %v649 = vadd.f32 %v164, %v648
    %v650 = vpop.f32.mrf.mxu0
    %651 = vmatprep.mubr.f32.mxu0 0.0
    %652 = vmatmul.mubr.f32.gmra.mxu0 %v576
    %v653 = vpop.f32.mrf.mxu0
    %v654 = vadd.f32 %v165, %v653
    %v655 = vpop.f32.mrf.mxu0
    %656 = vdwg.mxu0
    %v657 = vsel %vm256, %v649, -inf
    %658 = vmax.xlane.f32.xlu0 %v657
    %v659 = vpop.xlane.xlu0 %658
    %v660 = vsel %vm256, %v654, -inf
    %661 = vmax.xlane.f32.xlu0 %v660
    %v662 = vpop.xlane.xlu0 %661
    %v663 = vsub.f32 %v649, %v659
    %v664 = vsub.f32 %v654, %v662
    %v665 = vmul.f32 %v663, 1.442695
    %v666 = vpow.pop %v665
    %v667 = vmul.f32 %v664, 1.442695
    %v668 = vpow.pop %v667
    %v669 = vsel %vm256, %v666, 0.0
    %670 = vadd.xlane.f32.xlu0 %v669
    %v671 = vpop.xlane.xlu0 %670
    %v672 = vsel %vm256, %v668, 0.0
    %673 = vadd.xlane.f32.xlu0 %v672
    %v674 = vpop.xlane.xlu0 %673
    %v675 = vrcp.pop %v671
    %v676 = vmul.f32 %v666, %v675
    %v677 = vrcp.pop %v674
    %v678 = vmul.f32 %v668, %v677
    %679 = vrot.lane.b32.xlu0 %v156, 48
    %v680 = vpop.permute.xlu0 %679
    %681 = vrot.lane.b32.xlu0 %v161, 48
    %v682 = vpop.permute.xlu0 %681
    %v686 = vsel %vm256, %v676, 0
    %v689 = vsel %vm256, %v678, 0
    %691 = vmatprep.subr.mxu0 0.0
    %692 = vmatpush1.msra.mxu0 0.0
    %693 = vmatprep.subr.mxu0 0.0
    %694 = vmatpush1.msra.mxu0 0.0
    %695 = vmatprep.subr.mxu0 0.0
    %696 = vmatpush1.msra.mxu0 0.0
    %697 = vmatprep.subr.mxu0 0.0
    %698 = vmatpush1.msra.mxu0 0.0
    %699 = vmatprep.subr.mxu0 0.0
    %700 = vmatpush1.msra.mxu0 0.0
    %701 = vmatprep.subr.mxu0 0.0
    %702 = vmatpush1.msra.mxu0 0.0
    %703 = vmatprep.subr.mxu0 0.0
    %704 = vmatpush1.msra.mxu0 0.0
    %705 = vmatprep.subr.mxu0 0.0
    %706 = vmatpush1.msra.mxu0 0.0
    %707 = vmatprep.subr.mxu0 0.0
    %708 = vmatpush1.msra.mxu0 0.0
    %709 = vmatprep.subr.mxu0 0.0
    %710 = vmatpush1.msra.mxu0 0.0
    %711 = vmatprep.subr.mxu0 0.0
    %712 = vmatpush1.msra.mxu0 0.0
    %713 = vmatprep.subr.mxu0 0.0
    %714 = vmatpush1.msra.mxu0 0.0
    %715 = vmatprep.subr.mxu0 0.0
    %716 = vmatpush1.msra.mxu0 0.0
    %717 = vmatprep.subr.mxu0 0.0
    %718 = vmatpush1.msra.mxu0 0.0
    %719 = vmatprep.subr.mxu0 0.0
    %720 = vmatpush1.msra.mxu0 %v682
    %721 = vmatprep.subr.mxu0 0.0
    %722 = vmatpush1.msra.mxu0 %v680
    %723 = vmatprep.subr.mxu0 0.0
    %724 = vmatpush2.msra.mxu0 0.0
    %725 = vmatprep.subr.mxu0 0.0
    %726 = vmatpush2.msra.mxu0 0.0
    %727 = vmatprep.subr.mxu0 0.0
    %728 = vmatpush2.msra.mxu0 0.0
    %729 = vmatprep.subr.mxu0 0.0
    %730 = vmatpush2.msra.mxu0 0.0
    %731 = vmatprep.subr.mxu0 0.0
    %732 = vmatpush2.msra.mxu0 0.0
    %733 = vmatprep.subr.mxu0 0.0
    %734 = vmatpush2.msra.mxu0 0.0
    %735 = vmatprep.subr.mxu0 0.0
    %736 = vmatpush2.msra.mxu0 0.0
    %737 = vmatprep.subr.mxu0 0.0
    %738 = vmatpush2.msra.mxu0 0.0
    %739 = vmatprep.subr.mxu0 0.0
    %740 = vmatpush2.msra.mxu0 0.0
    %741 = vmatprep.subr.mxu0 0.0
    %742 = vmatpush2.msra.mxu0 0.0
    %743 = vmatprep.subr.mxu0 0.0
    %744 = vmatpush2.msra.mxu0 0.0
    %745 = vmatprep.subr.mxu0 0.0
    %746 = vmatpush2.msra.mxu0 0.0
    %747 = vmatprep.subr.mxu0 0.0
    %748 = vmatpush2.msra.mxu0 0.0
    %749 = vmatprep.subr.mxu0 0.0
    %750 = vmatpush2.msra.mxu0 0.0
    %751 = vmatprep.subr.mxu0 0.0
    %752 = vmatpush2.msra.mxu0 0.0
    %753 = vmatprep.subr.mxu0 0.0
    %754 = vmatpush2.msra.mxu0 0.0
    %755 = vmatprep.mubr.f32.mxu0 0.0
    %756 = vmatmul.mubr.f32.gmra.mxu0 %v686
    %v757 = vpop.f32.mrf.mxu0
    %v758 = vadd.f32 0.0, %v757
    %v759 = vpop.f32.mrf.mxu0
    %760 = vmatprep.mubr.f32.mxu0 0.0
    %761 = vmatmul.mubr.f32.gmra.mxu0 %v689
    %v762 = vpop.f32.mrf.mxu0
    %v763 = vadd.f32 0.0, %v762
    %v764 = vpop.f32.mrf.mxu0
    %765 = vdwg.mxu0
    %766 = vrot.lane.b32.xlu0 %v156, 104
    %v767 = vpop.permute.xlu0 %766
    %768 = vrot.lane.b32.xlu0 %v161, 104
    %v769 = vpop.permute.xlu0 %768
    %770 = vrot.lane.b32.xlu0 %v156, 72
    %v771 = vpop.permute.xlu0 %770
    %772 = vrot.lane.b32.xlu0 %v161, 72
    %v773 = vpop.permute.xlu0 %772
    %v774 = vsel %vm172, %v767, 0
    %v776 = vsel %vm172, %v769, 0
    %v778 = vsel %vm172, %v771, 0
    %v780 = vsel %vm172, %v773, 0
    %782 = vmatprep.subr.mxu0 0.0
    %783 = vmatpush1.xpose.msra.mxu0 0.0
    %784 = vmatprep.subr.mxu0 0.0
    %785 = vmatpush1.xpose.msra.mxu0 0.0
    %786 = vmatprep.subr.mxu0 0.0
    %787 = vmatpush1.xpose.msra.mxu0 0.0
    %788 = vmatprep.subr.mxu0 0.0
    %789 = vmatpush1.xpose.msra.mxu0 0.0
    %790 = vmatprep.subr.mxu0 0.0
    %791 = vmatpush1.xpose.msra.mxu0 0.0
    %792 = vmatprep.subr.mxu0 0.0
    %793 = vmatpush1.xpose.msra.mxu0 0.0
    %794 = vmatprep.subr.mxu0 0.0
    %795 = vmatpush1.xpose.msra.mxu0 0.0
    %796 = vmatprep.subr.mxu0 0.0
    %797 = vmatpush1.xpose.msra.mxu0 0.0
    %798 = vmatprep.subr.mxu0 0.0
    %799 = vmatpush1.xpose.msra.mxu0 0.0
    %800 = vmatprep.subr.mxu0 0.0
    %801 = vmatpush1.xpose.msra.mxu0 0.0
    %802 = vmatprep.subr.mxu0 0.0
    %803 = vmatpush1.xpose.msra.mxu0 0.0
    %804 = vmatprep.subr.mxu0 0.0
    %805 = vmatpush1.xpose.msra.mxu0 0.0
    %806 = vmatprep.subr.mxu0 0.0
    %807 = vmatpush1.xpose.msra.mxu0 0.0
    %808 = vmatprep.subr.mxu0 0.0
    %809 = vmatpush1.xpose.msra.mxu0 0.0
    %810 = vmatprep.subr.mxu0 0.0
    %811 = vmatpush1.xpose.msra.mxu0 %v780
    %812 = vmatprep.subr.mxu0 0.0
    %813 = vmatpush1.xpose.msra.mxu0 %v778
    %814 = vmatprep.subr.mxu0 0.0
    %815 = vmatpush2.xpose.msra.mxu0 0.0
    %816 = vmatprep.subr.mxu0 0.0
    %817 = vmatpush2.xpose.msra.mxu0 0.0
    %818 = vmatprep.subr.mxu0 0.0
    %819 = vmatpush2.xpose.msra.mxu0 0.0
    %820 = vmatprep.subr.mxu0 0.0
    %821 = vmatpush2.xpose.msra.mxu0 0.0
    %822 = vmatprep.subr.mxu0 0.0
    %823 = vmatpush2.xpose.msra.mxu0 0.0
    %824 = vmatprep.subr.mxu0 0.0
    %825 = vmatpush2.xpose.msra.mxu0 0.0
    %826 = vmatprep.subr.mxu0 0.0
    %827 = vmatpush2.xpose.msra.mxu0 0.0
    %828 = vmatprep.subr.mxu0 0.0
    %829 = vmatpush2.xpose.msra.mxu0 0.0
    %830 = vmatprep.subr.mxu0 0.0
    %831 = vmatpush2.xpose.msra.mxu0 0.0
    %832 = vmatprep.subr.mxu0 0.0
    %833 = vmatpush2.xpose.msra.mxu0 0.0
    %834 = vmatprep.subr.mxu0 0.0
    %835 = vmatpush2.xpose.msra.mxu0 0.0
    %836 = vmatprep.subr.mxu0 0.0
    %837 = vmatpush2.xpose.msra.mxu0 0.0
    %838 = vmatprep.subr.mxu0 0.0
    %839 = vmatpush2.xpose.msra.mxu0 0.0
    %840 = vmatprep.subr.mxu0 0.0
    %841 = vmatpush2.xpose.msra.mxu0 0.0
    %842 = vmatprep.subr.mxu0 0.0
    %843 = vmatpush2.xpose.msra.mxu0 0.0
    %844 = vmatprep.subr.mxu0 0.0
    %845 = vmatpush2.xpose.msra.mxu0 0.0
    %846 = vmatprep.mubr.f32.mxu0 0.0
    %847 = vmatmul.mubr.f32.gmra.mxu0 %v774
    %v848 = vpop.f32.mrf.mxu0
    %v849 = vadd.f32 %v164, %v848
    %v850 = vpop.f32.mrf.mxu0
    %851 = vmatprep.mubr.f32.mxu0 0.0
    %852 = vmatmul.mubr.f32.gmra.mxu0 %v776
    %v853 = vpop.f32.mrf.mxu0
    %v854 = vadd.f32 %v165, %v853
    %v855 = vpop.f32.mrf.mxu0
    %856 = vdwg.mxu0
    %v857 = vsel %vm256, %v849, -inf
    %858 = vmax.xlane.f32.xlu0 %v857
    %v859 = vpop.xlane.xlu0 %858
    %v860 = vsel %vm256, %v854, -inf
    %861 = vmax.xlane.f32.xlu0 %v860
    %v862 = vpop.xlane.xlu0 %861
    %v863 = vsub.f32 %v849, %v859
    %v864 = vsub.f32 %v854, %v862
    %v865 = vmul.f32 %v863, 1.442695
    %v866 = vpow.pop %v865
    %v867 = vmul.f32 %v864, 1.442695
    %v868 = vpow.pop %v867
    %v869 = vsel %vm256, %v866, 0.0
    %870 = vadd.xlane.f32.xlu0 %v869
    %v871 = vpop.xlane.xlu0 %870
    %v872 = vsel %vm256, %v868, 0.0
    %873 = vadd.xlane.f32.xlu0 %v872
    %v874 = vpop.xlane.xlu0 %873
    %v875 = vrcp.pop %v871
    %v876 = vmul.f32 %v866, %v875
    %v877 = vrcp.pop %v874
    %v878 = vmul.f32 %v868, %v877
    %879 = vrot.lane.b32.xlu0 %v156, 40
    %v880 = vpop.permute.xlu0 %879
    %881 = vrot.lane.b32.xlu0 %v161, 40
    %v882 = vpop.permute.xlu0 %881
    %v886 = vsel %vm256, %v876, 0
    %v889 = vsel %vm256, %v878, 0
    %891 = vmatprep.subr.mxu0 0.0
    %892 = vmatpush1.msra.mxu0 0.0
    %893 = vmatprep.subr.mxu0 0.0
    %894 = vmatpush1.msra.mxu0 0.0
    %895 = vmatprep.subr.mxu0 0.0
    %896 = vmatpush1.msra.mxu0 0.0
    %897 = vmatprep.subr.mxu0 0.0
    %898 = vmatpush1.msra.mxu0 0.0
    %899 = vmatprep.subr.mxu0 0.0
    %900 = vmatpush1.msra.mxu0 0.0
    %901 = vmatprep.subr.mxu0 0.0
    %902 = vmatpush1.msra.mxu0 0.0
    %903 = vmatprep.subr.mxu0 0.0
    %904 = vmatpush1.msra.mxu0 0.0
    %905 = vmatprep.subr.mxu0 0.0
    %906 = vmatpush1.msra.mxu0 0.0
    %907 = vmatprep.subr.mxu0 0.0
    %908 = vmatpush1.msra.mxu0 0.0
    %909 = vmatprep.subr.mxu0 0.0
    %910 = vmatpush1.msra.mxu0 0.0
    %911 = vmatprep.subr.mxu0 0.0
    %912 = vmatpush1.msra.mxu0 0.0
    %913 = vmatprep.subr.mxu0 0.0
    %914 = vmatpush1.msra.mxu0 0.0
    %915 = vmatprep.subr.mxu0 0.0
    %916 = vmatpush1.msra.mxu0 0.0
    %917 = vmatprep.subr.mxu0 0.0
    %918 = vmatpush1.msra.mxu0 0.0
    %919 = vmatprep.subr.mxu0 0.0
    %920 = vmatpush1.msra.mxu0 %v882
    %921 = vmatprep.subr.mxu0 0.0
    %922 = vmatpush1.msra.mxu0 %v880
    %923 = vmatprep.subr.mxu0 0.0
    %924 = vmatpush2.msra.mxu0 0.0
    %925 = vmatprep.subr.mxu0 0.0
    %926 = vmatpush2.msra.mxu0 0.0
    %927 = vmatprep.subr.mxu0 0.0
    %928 = vmatpush2.msra.mxu0 0.0
    %929 = vmatprep.subr.mxu0 0.0
    %930 = vmatpush2.msra.mxu0 0.0
    %931 = vmatprep.subr.mxu0 0.0
    %932 = vmatpush2.msra.mxu0 0.0
    %933 = vmatprep.subr.mxu0 0.0
    %934 = vmatpush2.msra.mxu0 0.0
    %935 = vmatprep.subr.mxu0 0.0
    %936 = vmatpush2.msra.mxu0 0.0
    %937 = vmatprep.subr.mxu0 0.0
    %938 = vmatpush2.msra.mxu0 0.0
    %939 = vmatprep.subr.mxu0 0.0
    %940 = vmatpush2.msra.mxu0 0.0
    %941 = vmatprep.subr.mxu0 0.0
    %942 = vmatpush2.msra.mxu0 0.0
    %943 = vmatprep.subr.mxu0 0.0
    %944 = vmatpush2.msra.mxu0 0.0
    %945 = vmatprep.subr.mxu0 0.0
    %946 = vmatpush2.msra.mxu0 0.0
    %947 = vmatprep.subr.mxu0 0.0
    %948 = vmatpush2.msra.mxu0 0.0
    %949 = vmatprep.subr.mxu0 0.0
    %950 = vmatpush2.msra.mxu0 0.0
    %951 = vmatprep.subr.mxu0 0.0
    %952 = vmatpush2.msra.mxu0 0.0
    %953 = vmatprep.subr.mxu0 0.0
    %954 = vmatpush2.msra.mxu0 0.0
    %955 = vmatprep.mubr.f32.mxu0 0.0
    %956 = vmatmul.mubr.f32.gmra.mxu0 %v886
    %v957 = vpop.f32.mrf.mxu0
    %v958 = vadd.f32 0.0, %v957
    %v959 = vpop.f32.mrf.mxu0
    %960 = vmatprep.mubr.f32.mxu0 0.0
    %961 = vmatmul.mubr.f32.gmra.mxu0 %v889
    %v962 = vpop.f32.mrf.mxu0
    %v963 = vadd.f32 0.0, %v962
    %v964 = vpop.f32.mrf.mxu0
    %965 = vdwg.mxu0
    %968 = vrot.lane.b32.xlu0 %v558, 8
    %v969 = vpop.permute.xlu0 %968
    %970 = vrot.lane.b32.xlu0 %v563, 8
    %v971 = vpop.permute.xlu0 %970
    %976 = vrot.lane.b32.xlu0 %v758, 16
    %v977 = vpop.permute.xlu0 %976
    %978 = vrot.lane.b32.xlu0 %v763, 16
    %v979 = vpop.permute.xlu0 %978
    %984 = vrot.lane.b32.xlu0 %v958, 24
    %v985 = vpop.permute.xlu0 %984
    %986 = vrot.lane.b32.xlu0 %v963, 24
    %v987 = vpop.permute.xlu0 %986
    %v990 = vsel %vm172, %v358, %v969
    %v991 = vsel %vm172, %v363, %v971
    %v992 = vsel %vm256, %v990, %v977
    %v993 = vsel %vm256, %v991, %v979
    %vm994 = vcmask 195584
    %v995 = vsel %vm994, %v992, %v985
    %v996 = vsel %vm994, %v993, %v987
    %v997 = vld [vmem:[#allocation7] sm:$0xff]
    %v998 = vld [vmem:[#allocation7 + $0x8] sm:$0xff]
    %v999 = vld [vmem:[#allocation7 + $0x10] sm:$0xff]
    %v1000 = vld [vmem:[#allocation7 + $0x18] sm:$0xff]
    %v1001 = vld [vmem:[%s3] sm:$0x1]
    %v1003 = vlaneseq
    %v1004 = vshrl.u32 %v1003, 7
    %v1005 = vsub.s32 0, %v1004
    %v1006 = vrot.slane %v1001, %v1005
    %v1009 = vsel %vm82, %v995, 0
    %v1012 = vsel %vm82, %v996, 0
    %1014 = vmatprep.subr.mxu0 0.0
    %1015 = vmatpush1.msra.mxu0 0.0
    %1016 = vmatprep.subr.mxu0 0.0
    %1017 = vmatpush1.msra.mxu0 0.0
    %1018 = vmatprep.subr.mxu0 0.0
    %1019 = vmatpush1.msra.mxu0 0.0
    %1020 = vmatprep.subr.mxu0 0.0
    %1021 = vmatpush1.msra.mxu0 0.0
    %1022 = vmatprep.subr.mxu0 0.0
    %1023 = vmatpush1.msra.mxu0 0.0
    %1024 = vmatprep.subr.mxu0 0.0
    %1025 = vmatpush1.msra.mxu0 0.0
    %1026 = vmatprep.subr.mxu0 0.0
    %1027 = vmatpush1.msra.mxu0 0.0
    %1028 = vmatprep.subr.mxu0 0.0
    %1029 = vmatpush1.msra.mxu0 0.0
    %1030 = vmatprep.subr.mxu0 0.0
    %1031 = vmatpush1.msra.mxu0 0.0
    %1032 = vmatprep.subr.mxu0 0.0
    %1033 = vmatpush1.msra.mxu0 0.0
    %1034 = vmatprep.subr.mxu0 0.0
    %1035 = vmatpush1.msra.mxu0 0.0
    %1036 = vmatprep.subr.mxu0 0.0
    %1037 = vmatpush1.msra.mxu0 0.0
    %1038 = vmatprep.subr.mxu0 0.0
    %1039 = vmatpush1.msra.mxu0 %v1000
    %1040 = vmatprep.subr.mxu0 0.0
    %1041 = vmatpush1.msra.mxu0 %v999
    %1042 = vmatprep.subr.mxu0 0.0
    %1043 = vmatpush1.msra.mxu0 %v998
    %1044 = vmatprep.subr.mxu0 0.0
    %1045 = vmatpush1.msra.mxu0 %v997
    %1046 = vmatprep.subr.mxu0 0.0
    %1047 = vmatpush2.msra.mxu0 0.0
    %1048 = vmatprep.subr.mxu0 0.0
    %1049 = vmatpush2.msra.mxu0 0.0
    %1050 = vmatprep.subr.mxu0 0.0
    %1051 = vmatpush2.msra.mxu0 0.0
    %1052 = vmatprep.subr.mxu0 0.0
    %1053 = vmatpush2.msra.mxu0 0.0
    %1054 = vmatprep.subr.mxu0 0.0
    %1055 = vmatpush2.msra.mxu0 0.0
    %1056 = vmatprep.subr.mxu0 0.0
    %1057 = vmatpush2.msra.mxu0 0.0
    %1058 = vmatprep.subr.mxu0 0.0
    %1059 = vmatpush2.msra.mxu0 0.0
    %1060 = vmatprep.subr.mxu0 0.0
    %1061 = vmatpush2.msra.mxu0 0.0
    %1062 = vmatprep.subr.mxu0 0.0
    %1063 = vmatpush2.msra.mxu0 0.0
    %1064 = vmatprep.subr.mxu0 0.0
    %1065 = vmatpush2.msra.mxu0 0.0
    %1066 = vmatprep.subr.mxu0 0.0
    %1067 = vmatpush2.msra.mxu0 0.0
    %1068 = vmatprep.subr.mxu0 0.0
    %1069 = vmatpush2.msra.mxu0 0.0
    %1070 = vmatprep.subr.mxu0 0.0
    %1071 = vmatpush2.msra.mxu0 0.0
    %1072 = vmatprep.subr.mxu0 0.0
    %1073 = vmatpush2.msra.mxu0 0.0
    %1074 = vmatprep.subr.mxu0 0.0
    %1075 = vmatpush2.msra.mxu0 0.0
    %1076 = vmatprep.subr.mxu0 0.0
    %1077 = vmatpush2.msra.mxu0 0.0
    %1078 = vmatprep.mubr.f32.mxu0 0.0
    %1079 = vmatmul.mubr.f32.gmra.mxu0 %v1009
    %v1080 = vpop.f32.mrf.mxu0
    %v1081 = vadd.f32 %v1006, %v1080
    %v1082 = vpop.f32.mrf.mxu0
    %1083 = vmatprep.mubr.f32.mxu0 0.0
    %1084 = vmatmul.mubr.f32.gmra.mxu0 %v1012
    %v1085 = vpop.f32.mrf.mxu0
    %v1086 = vadd.f32 %v1006, %v1085
    %v1087 = vpop.f32.mrf.mxu0
    %1088 = vdwg.mxu0
    %1089 = vst.msk [vmem:[#allocation10] sm:$0xff] %vm82, %v1081
    %1090 = vst.msk [vmem:[#allocation10 + $0x8] sm:$0xff] %vm82, %v1086
    // Predicated region
    $region38: #{tpu_custom_call.1} parent=1 // pred_check
      _
    $region39: #{tpu_custom_call.1} parent=1 // pred_check_branch
      %1092 = sbr.rel (0) target = $region41
    $region40: #{tpu_custom_call.1} parent=1 // pred_region
      %s1094 = ssub.s32 256, 256
      %1095 = vsyncadd [#allocation4], %s1094
      %s1096 = sshll.u32 [#allocation10], 4
      %s1097 = int_to_ptr.vmem [resolvable:$true] %s1096
      %1102 = dma.vmem_to_hbm [thread:$0]  %s1097, 256, %s5, [#allocation4], 128, 128, 8
    $region41: #{tpu_custom_call.1} parent=1 // pred_fallthru
      _
    // Predicated region
    $region42: #{tpu_custom_call.1} parent=1 // pred_check
      _
    $region43: #{tpu_custom_call.1} parent=1 // pred_check_branch
      %1104 = sbr.rel (0) target = $region45
    $region44: #{tpu_custom_call.1} parent=1 // pred_region
      %1105 = dma.done [#allocation4], 256
    $region45: #{tpu_custom_call.1} parent=1 // pred_fallthru
      _
    %1106 = vsyncpa [#allocation3], 1
    %1107 = vsyncpa [#allocation6], 1
    %1108 = vsyncpa [#allocation9], 1
    %1109 = vsyncpa [#allocation4], 1

</llo_original>
